<compile_context>
chip_gen: v7x
topology: tpu7x:2x2x1
jax: 0.10.0
libtpu: 0.0.40
codegen_flags: <defaults>
</compile_context>

<pallas_src>
import functools

import jax
import jax.numpy as jnp
from jax import lax
from jax.experimental import pallas as pl
from jax.experimental.pallas import tpu as pltpu

BN_EPS = 1e-3


def _cdiv(a, b):
    return -(-a // b)


def _round_up(a, b):
    return _cdiv(a, b) * b


def _pick_vmem_limit():
    # ~3/4 of physical VMEM, capped at 100 MiB: ~96 MiB on v5e/v6e (128 MiB
    # physical), ~48 MiB on v7x (64 MiB per TensorCore).
    try:
        cap = pltpu.get_tpu_info().vmem_capacity_bytes
        return int(min(100 * 1024 * 1024, cap * 3 // 4))
    except Exception:  # conservative fallback, safe on all generations
        return 48 * 1024 * 1024


def _single_buffered_spec(shape):
    """Grid-invariant operand: constant index_map + single buffering (the block
    never changes across grid steps, so double-buffering only wastes VMEM)."""
    idx = lambda i: (0,) * len(shape)
    try:
        return pl.BlockSpec(shape, idx, pipeline_mode=pl.Buffered(1))
    except TypeError:  # older jax without pipeline_mode: default buffering
        return pl.BlockSpec(shape, idx)


def _conv_stats_kernel(patches_ref, w_ref, conv_ref, stats_ref):
    # patches_ref: (tile_rows, G*K)     bf16 -- tile_rows groups of G pixels
    # w_ref:       (G*K, G*Cout)        bf16 block-diagonal weight kron(I_G, W)
    # conv_ref:    (tile_rows, G*Cout)  bf16 conv output for this tile
    # stats_ref:   (8, G*Cout) f32 partial stats for THIS tile:
    #              row 0 = sum(conv), row 1 = sum(conv^2), rows 2..7 = 0.
    conv = jnp.dot(patches_ref[...], w_ref[...],
                   preferred_element_type=jnp.float32)        # f32 MXU accumulate
    conv_ref[...] = conv.astype(conv_ref.dtype)
    s1 = jnp.sum(conv, axis=0, keepdims=True)
    s2 = jnp.sum(conv * conv, axis=0, keepdims=True)
    pad = jnp.zeros((6, conv.shape[1]), jnp.float32)
    stats_ref[...] = jnp.concatenate([s1, s2, pad], axis=0)   # single full store


def _bn_relu_kernel(conv_ref, sb_ref, o_ref):
    # conv_ref: (tile_rows, G*Cout) bf16; sb_ref rows: 0 = scale, 1 = bias.
    y = conv_ref[...].astype(jnp.float32) * sb_ref[0:1, :] + sb_ref[1:2, :]
    o_ref[...] = jnp.maximum(y, 0.0)


@functools.partial(jax.jit, static_argnames=("padding", "tile_budget_bytes"))
def basic_conv2d(x, weight, gamma, beta, *, padding=1,
                 tile_budget_bytes=2 * 1024 * 1024):
    """x: (N, Cin, H, W) NCHW f32.  weight: (Cout, Cin, kh, kw) PyTorch OIHW.
    stride=1 conv (bias=False), BatchNorm2d(eps=1e-3, training-mode batch
    statistics, biased variance), ReLU.  Returns NCHW f32."""
    N, Cin, H, W = x.shape
    Cout, _, kh, kw = weight.shape
    Hout = H + 2 * padding - kh + 1
    Wout = W + 2 * padding - kw + 1
    K = Cin * kh * kw
    R = N * Hout * Wout                       # true pixel count

    # ---- im2col in NHWC pixel order, built directly in bf16 (half the bytes).
    # TODO(synk): fold the im2col into pass 1 (halo DMA over an NHWC bf16 input
    # with memory_space=pl.ANY + pltpu.make_async_copy, accumulating kh*kw
    # shifted matmuls) to remove the kh*kw HBM amplification of the activation.
    x_nhwc = jnp.transpose(x, (0, 2, 3, 1)).astype(jnp.bfloat16)
    xp = jnp.pad(x_nhwc, ((0, 0), (padding, padding), (padding, padding), (0, 0)))
    patch_list = [xp[:, i:i + Hout, j:j + Wout, :]
                  for i in range(kh) for j in range(kw)]
    patches = jnp.concatenate(patch_list, axis=-1).reshape(R, K)   # bf16

    # ---- lane-group packing: G consecutive pixels share one matmul row so the
    # output block is ~128 lanes wide (G*Cout) without any in-kernel relayout.
    G = 1 if Cout >= 128 else min(Wout, _cdiv(128, Cout))
    GK, GC = G * K, G * Cout

    # ---- pixel-group tiling from a VMEM byte budget, capped so there are
    # >= MIN_TILES grid steps (pipelining + megacore) and an even tile count
    # (v7x shards the "parallel" axis across its 2 TensorCores).
    rows = _cdiv(R, G)                         # total pixel-group rows
    per_row_bytes = 2 * GK + 2 * GC + 4 * GC   # patches + conv(bf16) + out(f32)
    MIN_TILES = 8
    tr_budget = max(16, (tile_budget_bytes // per_row_bytes) // 16 * 16)
    tr_cap = max(16, _round_up(_cdiv(rows, MIN_TILES), 16))
    tile_rows = min(tr_budget, tr_cap, _round_up(rows, 16))
    num_tiles = _cdiv(rows, tile_rows)
    if num_tiles > 1 and num_tiles % 2:
        num_tiles += 1                         # even split across cores
    rows_pad = num_tiles * tile_rows
    R_pad = rows_pad * G
    if R_pad > R:
        # Padded pixels are all-zero -> conv = 0 -> no stats pollution
        # (the wrapper divides by the true R).
        patches = jnp.pad(patches, ((0, R_pad - R), (0, 0)))
    patches_rows = patches.reshape(rows_pad, GK)   # free row-major reshape

    # weight (Cout,Cin,kh,kw) -> (K,Cout) matching patch K order, then the
    # G-bounded block-diagonal kron(I_G, W): (rows, G*K) @ big_w = (rows, G*Cout).
    w_mat = (jnp.transpose(weight, (2, 3, 1, 0))
             .reshape(K, Cout).astype(jnp.bfloat16))
    big_w = jnp.kron(jnp.eye(G, dtype=jnp.bfloat16), w_mat)

    cparams = pltpu.CompilerParams(
        dimension_semantics=("parallel",),     # v7x: 2 TCs split the tiles
        vmem_limit_bytes=_pick_vmem_limit(),
    )

    # ---- pass 1: conv matmul -> bf16 conv to HBM + per-tile partial stats ----
    conv_rows, stats = pl.pallas_call(
        _conv_stats_kernel,
        out_shape=(jax.ShapeDtypeStruct((rows_pad, GC), jnp.bfloat16),
                   jax.ShapeDtypeStruct((num_tiles * 8, GC), jnp.float32)),
        grid_spec=pltpu.PrefetchScalarGridSpec(
            num_scalar_prefetch=0,
            grid=(num_tiles,),
            in_specs=[
                pl.BlockSpec((tile_rows, GK), lambda i: (i, 0)),
                _single_buffered_spec((GK, GC)),
            ],
            out_specs=[
                pl.BlockSpec((tile_rows, GC), lambda i: (i, 0)),
                pl.BlockSpec((8, GC), lambda i: (i, 0)),
            ]),
        compiler_params=cparams,
    )(patches_rows, big_w)

    # Merge per-tile stats (tiny), fold the G replication, build BN scale/bias
    # (training-mode, biased variance) in f32.
    # TODO(synk): E[x^2]-mean^2 can cancel catastrophically for very large R
    # with |mean| >> std; switch to a shifted/Welford merge for that regime.
    stats = stats.reshape(num_tiles, 8, GC)
    sum_c = stats[:, 0, :].sum(axis=0).reshape(G, Cout).sum(axis=0)
    sq_c = stats[:, 1, :].sum(axis=0).reshape(G, Cout).sum(axis=0)
    mean = sum_c / R
    var = jnp.maximum(sq_c / R - mean * mean, 0.0)
    inv_std = lax.rsqrt(var + BN_EPS)
    scale = gamma.astype(jnp.float32) * inv_std
    bias = beta.astype(jnp.float32) - mean * scale
    sb = jnp.zeros((8, GC), jnp.float32)
    sb = sb.at[0].set(jnp.tile(scale, G))
    sb = sb.at[1].set(jnp.tile(bias, G))

    # ---- pass 2: elementwise BN scale/bias + ReLU over the stored bf16 conv ----
    out_rows = pl.pallas_call(
        _bn_relu_kernel,
        out_shape=jax.ShapeDtypeStruct((rows_pad, GC), jnp.float32),
        grid_spec=pltpu.PrefetchScalarGridSpec(
            num_scalar_prefetch=0,
            grid=(num_tiles,),
            in_specs=[
                pl.BlockSpec((tile_rows, GC), lambda i: (i, 0)),
                _single_buffered_spec((8, GC)),
            ],
            out_specs=pl.BlockSpec((tile_rows, GC), lambda i: (i, 0))),
        compiler_params=cparams,
    )(conv_rows, sb)

    # (rows_pad, G*Cout) -> (R, Cout) == flattened NHWC -> NCHW (PyTorch order).
    # The module contract is NCHW f32; a consumer that accepts NHWC (or bf16)
    # could skip this trailing transpose and take the kernel output directly.
    out = out_rows.reshape(rows_pad * G, Cout)[:R].reshape(N, Hout, Wout, Cout)
    return jnp.transpose(out, (0, 3, 1, 2))


def _reference(x, weight, gamma, beta, *, padding):
    conv = lax.conv_general_dilated(
        x, weight, window_strides=(1, 1),
        padding=[(padding, padding), (padding, padding)],
        dimension_numbers=("NCHW", "OIHW", "NCHW"))
    mean = conv.mean(axis=(0, 2, 3), keepdims=True)
    var = ((conv - mean) ** 2).mean(axis=(0, 2, 3), keepdims=True)
    y = (conv - mean) * lax.rsqrt(var + BN_EPS)
    y = y * gamma.reshape(1, -1, 1, 1) + beta.reshape(1, -1, 1, 1)
    return jnp.maximum(y, 0.0)


if __name__ == "__main__":
    key = jax.random.PRNGKey(0)
    k_w, k_g, k_x = jax.random.split(key, 3)

    # module config: BasicConv2d(in_channels=4, out_channels=8,
    #                            kernel_size=3, padding=1)
    N, Cin, H, W = 2, 4, 16, 16
    Cout, ksize, pad = 8, 3, 1

    # kaiming_normal(a=0, mode='fan_in'): std = sqrt(2 / fan_in)
    fan_in = Cin * ksize * ksize
    weight = jax.random.normal(k_w, (Cout, Cin, ksize, ksize), jnp.float32) \
        * jnp.sqrt(2.0 / fan_in)
    # BN: weight ~ N(1.0, 0.02), bias = 0
    gamma = 1.0 + 0.02 * jax.random.normal(k_g, (Cout,), jnp.float32)
    beta = jnp.zeros((Cout,), jnp.float32)
    x = jax.random.normal(k_x, (N, Cin, H, W), jnp.float32)

    out = basic_conv2d(x, weight, gamma, beta, padding=pad)
    jax.block_until_ready(out)
    assert out.shape == (N, Cout, H, W)
    assert bool(jnp.all(jnp.isfinite(out)))

    # Loose tolerance: inputs / stored conv are bf16 (f32 MXU accumulate).
    ref = _reference(x, weight, gamma, beta, padding=pad)
    err = float(jnp.max(jnp.abs(out - ref)))
    assert err < 0.15, f"max abs error vs reference too large: {err}"
    print("KERNEL_OK")
</pallas_src>

<mosaic_0001>
module attributes {stable_mosaic.version = 11 : i64} {
  func.func @_conv_stats_kernel(%arg0: i32, %arg1: memref<16x576xbf16, #tpu.memory_space<vmem>>, %arg2: memref<576x128xbf16, #tpu.memory_space<vmem>>, %arg3: memref<16x128xbf16, #tpu.memory_space<vmem>>, %arg4: memref<8x128xf32, #tpu.memory_space<vmem>>) attributes {dimension_semantics = [#tpu.dimension_semantics<parallel>], iteration_bounds = array<i64: 2>, scalar_prefetch = 0 : i64, scratch_operands = 0 : i64, tpu.core_type = #tpu.core_type<tc>, window_params = [{transform_indices = @transform_0, window_bounds = array<i64: 16, 576>}, {pipeline_mode = #tpu.pipeline_mode<synchronous>, transform_indices = @transform_1, window_bounds = array<i64: 576, 128>}, {transform_indices = @transform_2, window_bounds = array<i64: 16, 128>}, {transform_indices = @transform_3, window_bounds = array<i64: 8, 128>}]} {
    %c0 = arith.constant 0 : index
    %c0_0 = arith.constant 0 : index
    %0 = vector.load %arg1[%c0, %c0_0] : memref<16x576xbf16, #tpu.memory_space<vmem>>, vector<16x576xbf16>
    %c0_1 = arith.constant 0 : index
    %c0_2 = arith.constant 0 : index
    %1 = vector.load %arg2[%c0_1, %c0_2] : memref<576x128xbf16, #tpu.memory_space<vmem>>, vector<576x128xbf16>
    %cst = arith.constant dense<0.000000e+00> : vector<16x128xf32>
    %2 = tpu.matmul %0, %1, %cst {dimension_numbers = #tpu.dot_dimension_numbers<[1], [0], [0], [1], [0, 0, 1, 1], [], []>} : vector<16x576xbf16>, vector<576x128xbf16>, vector<16x128xf32> -> vector<16x128xf32>
    %3 = arith.truncf %2 : vector<16x128xf32> to vector<16x128xbf16>
    %c0_3 = arith.constant 0 : index
    %c0_4 = arith.constant 0 : index
    %4 = vector.load %arg3[%c0_3, %c0_4] : memref<16x128xbf16, #tpu.memory_space<vmem>>, vector<16x128xbf16>
    tpu.vector_store %arg3[%c0_3, %c0_4], %3 {strides = array<i32>} : memref<16x128xbf16, #tpu.memory_space<vmem>>, vector<16x128xbf16>,
    %cst_5 = arith.constant dense<0.000000e+00> : vector<128xf32>
    %5 = vector.multi_reduction <add>, %2, %cst_5 [0] : vector<16x128xf32> to vector<128xf32>
    %6 = vector.shape_cast %5 : vector<128xf32> to vector<1x128xf32>
    %7 = arith.mulf %2, %2 : vector<16x128xf32>
    %cst_6 = arith.constant dense<0.000000e+00> : vector<128xf32>
    %8 = vector.multi_reduction <add>, %7, %cst_6 [0] : vector<16x128xf32> to vector<128xf32>
    %9 = vector.shape_cast %8 : vector<128xf32> to vector<1x128xf32>
    %cst_7 = arith.constant 0.000000e+00 : f32
    %10 = vector.broadcast %cst_7 : f32 to vector<6x128xf32>
    %11 = tpu.concatenate %6, %9, %10 in 0 : vector<1x128xf32>, vector<1x128xf32>, vector<6x128xf32> -> vector<8x128xf32>
    %c0_8 = arith.constant 0 : index
    %c0_9 = arith.constant 0 : index
    %12 = vector.load %arg4[%c0_8, %c0_9] : memref<8x128xf32, #tpu.memory_space<vmem>>, vector<8x128xf32>
    tpu.vector_store %arg4[%c0_8, %c0_9], %11 {strides = array<i32>} : memref<8x128xf32, #tpu.memory_space<vmem>>, vector<8x128xf32>,
    return
  }
  func.func @transform_0(%arg0: i32) -> (i32, i32) {
    %c0_i32 = arith.constant 0 : i32
    %c0_i32_0 = arith.constant 0 : i32
    return %arg0, %c0_i32 : i32, i32
  }
  func.func @transform_1(%arg0: i32) -> (i32, i32) {
    %c0_i32 = arith.constant 0 : i32
    %c0_i32_0 = arith.constant 0 : i32
    %c0_i32_1 = arith.constant 0 : i32
    return %c0_i32, %c0_i32_0 : i32, i32
  }
  func.func @transform_2(%arg0: i32) -> (i32, i32) {
    %c0_i32 = arith.constant 0 : i32
    %c0_i32_0 = arith.constant 0 : i32
    return %arg0, %c0_i32 : i32, i32
  }
  func.func @transform_3(%arg0: i32) -> (i32, i32) {
    %c0_i32 = arith.constant 0 : i32
    %c0_i32_0 = arith.constant 0 : i32
    return %arg0, %c0_i32 : i32, i32
  }
}

module attributes {stable_mosaic.version = 11 : i64} {
  func.func @_bn_relu_kernel(%arg0: i32, %arg1: memref<16x128xbf16, #tpu.memory_space<vmem>>, %arg2: memref<8x128xf32, #tpu.memory_space<vmem>>, %arg3: memref<16x128xf32, #tpu.memory_space<vmem>>) attributes {dimension_semantics = [#tpu.dimension_semantics<parallel>], iteration_bounds = array<i64: 2>, scalar_prefetch = 0 : i64, scratch_operands = 0 : i64, tpu.core_type = #tpu.core_type<tc>, window_params = [{transform_indices = @transform_0, window_bounds = array<i64: 16, 128>}, {pipeline_mode = #tpu.pipeline_mode<synchronous>, transform_indices = @transform_1, window_bounds = array<i64: 8, 128>}, {transform_indices = @transform_2, window_bounds = array<i64: 16, 128>}]} {
    %c0 = arith.constant 0 : index
    %c0_0 = arith.constant 0 : index
    %0 = vector.load %arg1[%c0, %c0_0] : memref<16x128xbf16, #tpu.memory_space<vmem>>, vector<16x128xbf16>
    %1 = arith.extf %0 : vector<16x128xbf16> to vector<16x128xf32>
    %c0_1 = arith.constant 0 : index
    %c0_2 = arith.constant 0 : index
    %2 = vector.load %arg2[%c0_1, %c0_2] : memref<8x128xf32, #tpu.memory_space<vmem>>, vector<1x128xf32>
    %3 = vector.broadcast %2 : vector<1x128xf32> to vector<16x128xf32>
    %4 = arith.mulf %1, %3 : vector<16x128xf32>
    %c1 = arith.constant 1 : index
    %c0_3 = arith.constant 0 : index
    %5 = vector.load %arg2[%c1, %c0_3] : memref<8x128xf32, #tpu.memory_space<vmem>>, vector<1x128xf32>
    %6 = vector.broadcast %5 : vector<1x128xf32> to vector<16x128xf32>
    %7 = arith.addf %4, %6 : vector<16x128xf32>
    %cst = arith.constant 0.000000e+00 : f32
    %8 = vector.broadcast %cst : f32 to vector<16x128xf32>
    %9 = arith.maximumf %7, %8 : vector<16x128xf32>
    %c0_4 = arith.constant 0 : index
    %c0_5 = arith.constant 0 : index
    %10 = vector.load %arg3[%c0_4, %c0_5] : memref<16x128xf32, #tpu.memory_space<vmem>>, vector<16x128xf32>
    tpu.vector_store %arg3[%c0_4, %c0_5], %9 {strides = array<i32>} : memref<16x128xf32, #tpu.memory_space<vmem>>, vector<16x128xf32>,
    return
  }
  func.func @transform_0(%arg0: i32) -> (i32, i32) {
    %c0_i32 = arith.constant 0 : i32
    %c0_i32_0 = arith.constant 0 : i32
    return %arg0, %c0_i32 : i32, i32
  }
  func.func @transform_1(%arg0: i32) -> (i32, i32) {
    %c0_i32 = arith.constant 0 : i32
    %c0_i32_0 = arith.constant 0 : i32
    %c0_i32_1 = arith.constant 0 : i32
    return %c0_i32, %c0_i32_0 : i32, i32
  }
  func.func @transform_2(%arg0: i32) -> (i32, i32) {
    %c0_i32 = arith.constant 0 : i32
    %c0_i32_0 = arith.constant 0 : i32
    return %arg0, %c0_i32 : i32, i32
  }
}

</mosaic_0001>

<llo_original>
// kernel: tile.13
$region0: #{tile.13}
  #allocation0 [shape = 's32[1]{0}', space=sflag, size = 0x4, scoped, tag = 'scoped memory for tile.13']
  %s0 = inlined_call_operand.vmem [shape: f32[8], index: 0, kind: input, shape index: {}]
  %s1 = inlined_call_operand.vmem [shape: f32[16,8], index: 1, kind: output, shape index: {}]
  // Predicated region
  $region2: #{tile.13} parent=0 // pred_check
    _
  $region3: #{tile.13} parent=0 // pred_check_branch
    %3 = sbr.rel (0) target = $region5
  $region4: #{tile.13} parent=0 // pred_region
    _
  $region5: #{tile.13} parent=0 // pred_fallthru
    _
  %v4 = vld [vmem:[%s0] ss:$0 sm:$0xff]
  %5 = vst [vmem:[%s1] sm:$0xff] %v4
  %s6 = scalar_lea.vmem %s1, 8
  %7 = vst [vmem:[%s6] sm:$0xff] %v4

// kernel: basic_conv2d.3
$region0: #{basic_conv2d.3}
  #allocation0 [shape = 'u32[]', space=smem, size = 0x4, offset = 0x4, fixed_abs, tag = 'smem constant byte address 0x4 - core index']
  #allocation1 [shape = 'u32[144,128]{1,0:T(1,128)}', space=vmem, size = 0x12000, scoped, tag = 'internal scratch']
  %s0 = inlined_call_operand.vmem [shape: bf16[32,128], index: 0, kind: input, shape index: {}]
  %s1 = inlined_call_operand.vmem [shape: f32[8,128], index: 1, kind: input, shape index: {}]
  %s2 = inlined_call_operand.vmem [shape: f32[32,128], index: 2, kind: output, shape index: {}]
  %s3 = sld [smem:[#allocation0]]
  $region41: #{basic_conv2d.3} parent=0
    _
  %s5 = ssub.s32 1, %s3
  %s6 = scalar_select 0, %s5, %s3
  loop: start=0, step=1, limit=4
  $region2: #{basic_conv2d.3} parent=0 // loop_pre_header
    _
  $region3: #{basic_conv2d.3} parent=0 // loop_header
    %s8 = sphi 0, %s12
    %p9 = scmp.ge.s32.totalorder %s8, 4
    %s18 = sphi 0, %s20
    %s21 = sphi 0, %s18
    %s22 = sphi 0, %s21
    %s38 = sphi 0, %s22
    %s42 = sphi 0, %s42
    %s44 = sphi 0, %s42
    %s45 = sphi 0, %s44
    %s59 = sphi 0, %s45
    %s65 = sphi 0, %s67
    %s68 = sphi 0, %s65
    %s69 = sphi 0, %s68
    %s85 = sphi 0, %s69
  $region4: #{basic_conv2d.3} parent=0 // loop_header_branch
    %11 = sbr.rel (%p9) target = $region8
  $region5: #{basic_conv2d.3} parent=0 // loop_body
    %s13 = ssub.s32 %s8, 1
    %s14 = ssub.s32 %s8, 2
    %s15 = sadd.s32 %s8, 1
    %s16 = ssub.s32 %s8, %s15
    %p17 = scmp.eq.s32.totalorder %s16, 0
    %s19 = sadd.s32 %s18, 1
    %s20 = scalar_select %p17, %s18, %s19
    %p23 = pneg %p17
    %p24 = scmp.eq.s32.totalorder %s8, 1
    %p25 = por %p23, %p24
    %p26 = scmp.ne.s32.totalorder %s18, %s21
    %p27 = scmp.eq.s32.totalorder %s8, 0
    %p28 = por %p26, %p27
    %p29 = scmp.ne.s32.totalorder %s18, %s21
    %p30 = scmp.eq.s32.totalorder %s13, 1
    %p31 = por %p29, %p30
    %p32 = scmp.ne.s32.totalorder %s21, %s22
    %p33 = scmp.eq.s32.totalorder %s13, 0
    %p34 = por %p32, %p33
    %p35 = scmp.ne.s32.totalorder %s21, %s22
    %p36 = scmp.eq.s32.totalorder %s14, 1
    %p37 = por %p35, %p36
    %p39 = scmp.ne.s32.totalorder %s22, %s38
    %p40 = scmp.eq.s32.totalorder %s14, 0
    %p41 = por %p39, %p40
    %s43 = sadd.s32 %s42, 1
    %p46 = scmp.eq.s32.totalorder %s8, 1
    %p47 = scmp.ne.s32.totalorder %s42, %s44
    %p48 = scmp.eq.s32.totalorder %s8, 0
    %p49 = por %p47, %p48
    %p50 = scmp.ne.s32.totalorder %s42, %s44
    %p51 = scmp.eq.s32.totalorder %s13, 1
    %p52 = por %p50, %p51
    %p53 = scmp.ne.s32.totalorder %s44, %s45
    %p54 = scmp.eq.s32.totalorder %s13, 0
    %p55 = por %p53, %p54
    %p56 = scmp.ne.s32.totalorder %s44, %s45
    %p57 = scmp.eq.s32.totalorder %s14, 1
    %p58 = por %p56, %p57
    %p60 = scmp.ne.s32.totalorder %s45, %s59
    %p61 = scmp.eq.s32.totalorder %s14, 0
    %p62 = por %p60, %p61
    %s63 = ssub.s32 %s8, %s15
    %p64 = scmp.eq.s32.totalorder %s63, 0
    %s66 = sadd.s32 %s65, 1
    %s67 = scalar_select %p64, %s65, %s66
    %p70 = pneg %p64
    %p71 = scmp.eq.s32.totalorder %s8, 1
    %p72 = por %p70, %p71
    %p73 = scmp.ne.s32.totalorder %s65, %s68
    %p74 = scmp.eq.s32.totalorder %s8, 0
    %p75 = por %p73, %p74
    %p76 = scmp.ne.s32.totalorder %s65, %s68
    %p77 = scmp.eq.s32.totalorder %s13, 1
    %p78 = por %p76, %p77
    %p79 = scmp.ne.s32.totalorder %s68, %s69
    %p80 = scmp.eq.s32.totalorder %s13, 0
    %p81 = por %p79, %p80
    %p82 = scmp.ne.s32.totalorder %s68, %s69
    %p83 = scmp.eq.s32.totalorder %s14, 1
    %p84 = por %p82, %p83
    %p86 = scmp.ne.s32.totalorder %s69, %s85
    %p87 = scmp.eq.s32.totalorder %s14, 0
    %p88 = por %p86, %p87
    %p89 = scmp.le.s32.totalorder 1, %s8
    %p90 = scmp.lt.s32.totalorder %s8, 3
    %p91 = pnand %p89, %p90
    %p92 = pneg %p91
    // Predicated region
    $region9: #{basic_conv2d.3} parent=5 // pred_check
      _
    $region10: #{basic_conv2d.3} parent=5 // pred_check_branch
      %94 = sbr.rel (%p91) target = $region12
    $region11: #{basic_conv2d.3} parent=5 // pred_region
      %s95 = ssub.s32 %s8, 1
      // Predicated region
      $region13: #{basic_conv2d.3} parent=11 // pred_check
        %p96 = pneg %p55
      $region14: #{basic_conv2d.3} parent=11 // pred_check_branch
        %98 = sbr.rel (%p96) target = $region16
      $region15: #{basic_conv2d.3} parent=11 // pred_region
        _
      $region16: #{basic_conv2d.3} parent=11 // pred_fallthru
        _
    $region12: #{basic_conv2d.3} parent=5 // pred_fallthru
      _
    %p99 = scmp.lt.s32.totalorder %s8, 2
    // Predicated region
    $region17: #{basic_conv2d.3} parent=5 // pred_check
      %p100 = pneg %p99
    $region18: #{basic_conv2d.3} parent=5 // pred_check_branch
      %102 = sbr.rel (%p100) target = $region20
    $region19: #{basic_conv2d.3} parent=5 // pred_region
      // Predicated region
      $region21: #{basic_conv2d.3} parent=19 // pred_check
        %p103 = pneg %p28
      $region22: #{basic_conv2d.3} parent=19 // pred_check_branch
        %105 = sbr.rel (%p103) target = $region24
      $region23: #{basic_conv2d.3} parent=19 // pred_region
        %s106 = smul.u32 2, %s8
        %p107 = scmp.lt.s32.totalorder %s106, 3
        %s108 = scalar_select %p107, %s106, 3
        %s109 = smul.addr %s108, 4
        %s110 = scalar_lea.vmem %s0, %s109
        %s111 = smul.u32 2, %s8
      $region24: #{basic_conv2d.3} parent=19 // pred_fallthru
        _
    $region20: #{basic_conv2d.3} parent=5 // pred_fallthru
      _
    %p112 = scmp.le.s32.totalorder 1, %s8
    %p113 = scmp.lt.s32.totalorder %s8, 3
    %p114 = pnand %p112, %p113
    %p115 = pneg %p114
    // Predicated region
    $region25: #{basic_conv2d.3} parent=5 // pred_check
      _
    $region26: #{basic_conv2d.3} parent=5 // pred_check_branch
      %117 = sbr.rel (%p114) target = $region28
    $region27: #{basic_conv2d.3} parent=5 // pred_region
      %s118 = ssub.s32 %s8, 1
      %s119 = smul.u32 2, %s13
      %p120 = scmp.lt.s32.totalorder %s119, 3
      %s121 = scalar_select %p120, %s119, 3
      %s122 = smul.addr %s121, 4
      %s123 = scalar_lea.vmem %s0, %s122
      %p124 = pneg %p34
      %p125 = pneg %p31
      %p126 = pneg %p55
      %p127 = pneg %p52
      %p128 = pneg %p81
      %p129 = pneg %p78
      %s130 = smul.u32 2, %s13
      %p131 = scmp.lt.s32.totalorder %s130, 3
      %s132 = scalar_select %p131, %s130, 3
      %s133 = smul.addr %s132, 8
      %s134 = scalar_lea.vmem %s2, %s133
      %s135 = smul.u32 2, %s13
      %p136 = scmp.lt.s32.totalorder %s135, 3
      %s137 = scalar_select %p136, %s135, 3
      %s138 = smul.addr %s137, 4
      %s139 = scalar_lea.vmem %s0, %s138
      %s140 = smul.u32 2, %s13
      %s141 = smul.u32 2, %s13
      %p142 = scmp.lt.s32.totalorder %s141, 3
      %s143 = scalar_select %p142, %s141, 3
      %s144 = smul.addr %s143, 8
      %s145 = scalar_lea.vmem %s2, %s144
      %s146 = smul.u32 2, %s13
      %v147 = vld [vmem:[%s139] sm:$0xf]
      %v148 = vld [vmem:[%s139 + $0x4] sm:$0xf]
      %v149 = vunpack.c.l.bf16 %v147
      %v150 = vunpack.c.l.bf16 %v148
      %v151 = vld [vmem:[%s1] sm:$0x1]
      %v152 = vlaneseq
      %v153 = vshrl.u32 %v152, 7
      %v154 = vsub.s32 0, %v153
      %v155 = vrot.slane %v151, %v154
      %v156 = vmul.f32 %v149, %v155
      %v157 = vmul.f32 %v150, %v155
      %v158 = vld [vmem:[%s1 + $0x1] sm:$0x1]
      %v159 = vlaneseq
      %v160 = vshrl.u32 %v159, 7
      %v161 = vsub.s32 0, %v160
      %v162 = vrot.slane %v158, %v161
      %v163 = vadd.f32 %v156, %v162
      %v164 = vadd.f32 %v157, %v162
      %v165 = vmax.f32 %v163, 0.0
      %v166 = vmax.f32 %v164, 0.0
      %167 = vst [vmem:[%s145] sm:$0xff] %v165
      %168 = vst [vmem:[%s145 + $0x8] sm:$0xff] %v166
      %s169 = smul.u32 2, %s13
      %p170 = scmp.lt.s32.totalorder %s169, 3
      %s171 = scalar_select %p170, %s169, 3
      %s172 = smul.addr %s171, 8
      %s173 = scalar_lea.vmem %s2, %s172
      // Predicated region
      $region29: #{basic_conv2d.3} parent=27 // pred_check
        %p174 = pneg %p78
      $region30: #{basic_conv2d.3} parent=27 // pred_check_branch
        %176 = sbr.rel (%p174) target = $region32
      $region31: #{basic_conv2d.3} parent=27 // pred_region
        %s177 = smul.u32 2, %s13
      $region32: #{basic_conv2d.3} parent=27 // pred_fallthru
        _
    $region28: #{basic_conv2d.3} parent=5 // pred_fallthru
      _
    %p178 = scmp.le.s32.totalorder 2, %s8
    // Predicated region
    $region33: #{basic_conv2d.3} parent=5 // pred_check
      %p179 = pneg %p178
    $region34: #{basic_conv2d.3} parent=5 // pred_check_branch
      %181 = sbr.rel (%p179) target = $region36
    $region35: #{basic_conv2d.3} parent=5 // pred_region
      %s182 = ssub.s32 %s8, 2
      // Predicated region
      $region37: #{basic_conv2d.3} parent=35 // pred_check
        %p183 = pneg %p84
      $region38: #{basic_conv2d.3} parent=35 // pred_check_branch
        %185 = sbr.rel (%p183) target = $region40
      $region39: #{basic_conv2d.3} parent=35 // pred_region
        %s186 = smul.u32 2, %s14
        %p187 = scmp.lt.s32.totalorder %s186, 3
        %s188 = scalar_select %p187, %s186, 3
        %s189 = smul.addr %s188, 8
        %s190 = scalar_lea.vmem %s2, %s189
      $region40: #{basic_conv2d.3} parent=35 // pred_fallthru
        _
    $region36: #{basic_conv2d.3} parent=5 // pred_fallthru
      _
  $region6: #{basic_conv2d.3} parent=0 // loop_footer
    %s12 = sadd.s32 1, %s8
  $region7: #{basic_conv2d.3} parent=0 // loop_footer_branch
    %7 = sbr.rel target = $region3
  $region8: #{basic_conv2d.3} parent=0 // loop_exit
    _

// kernel: basic_conv2d.2
$region0: #{basic_conv2d.2}
  #allocation0 [shape = 'u32[]', space=smem, size = 0x4, offset = 0x4, fixed_abs, tag = 'smem constant byte address 0x4 - core index']
  #allocation1 [shape = 'u32[144,128]{1,0:T(1,128)}', space=vmem, size = 0x12000, scoped, tag = 'internal scratch']
  %s0 = inlined_call_operand.vmem [shape: bf16[32,576], index: 0, kind: input, shape index: {}]
  %s1 = inlined_call_operand.vmem [shape: bf16[576,128], index: 1, kind: input, shape index: {}]
  %s2 = inlined_call_operand.vmem [shape: bf16[32,128], index: 2, kind: output, shape index: {0}]
  %s3 = inlined_call_operand.vmem [shape: f32[16,128], index: 3, kind: output, shape index: {1}]
  %4 = xla_tuple %s2, %s3
  %s5 = sld [smem:[#allocation0]]
  $region49: #{basic_conv2d.2} parent=0
    _
  %s7 = ssub.s32 1, %s5
  %s8 = scalar_select 0, %s7, %s5
  loop: start=0, step=1, limit=4
  $region2: #{basic_conv2d.2} parent=0 // loop_pre_header
    _
  $region3: #{basic_conv2d.2} parent=0 // loop_header
    %s10 = sphi 0, %s14
    %p11 = scmp.ge.s32.totalorder %s10, 4
    %s20 = sphi 0, %s22
    %s23 = sphi 0, %s20
    %s24 = sphi 0, %s23
    %s40 = sphi 0, %s24
    %s44 = sphi 0, %s44
    %s46 = sphi 0, %s44
    %s47 = sphi 0, %s46
    %s61 = sphi 0, %s47
    %s67 = sphi 0, %s69
    %s70 = sphi 0, %s67
    %s71 = sphi 0, %s70
    %s87 = sphi 0, %s71
    %s93 = sphi 0, %s95
    %s96 = sphi 0, %s93
    %s97 = sphi 0, %s96
    %s113 = sphi 0, %s97
  $region4: #{basic_conv2d.2} parent=0 // loop_header_branch
    %13 = sbr.rel (%p11) target = $region8
  $region5: #{basic_conv2d.2} parent=0 // loop_body
    %s15 = ssub.s32 %s10, 1
    %s16 = ssub.s32 %s10, 2
    %s17 = sadd.s32 %s10, 1
    %s18 = ssub.s32 %s10, %s17
    %p19 = scmp.eq.s32.totalorder %s18, 0
    %s21 = sadd.s32 %s20, 1
    %s22 = scalar_select %p19, %s20, %s21
    %p25 = pneg %p19
    %p26 = scmp.eq.s32.totalorder %s10, 1
    %p27 = por %p25, %p26
    %p28 = scmp.ne.s32.totalorder %s20, %s23
    %p29 = scmp.eq.s32.totalorder %s10, 0
    %p30 = por %p28, %p29
    %p31 = scmp.ne.s32.totalorder %s20, %s23
    %p32 = scmp.eq.s32.totalorder %s15, 1
    %p33 = por %p31, %p32
    %p34 = scmp.ne.s32.totalorder %s23, %s24
    %p35 = scmp.eq.s32.totalorder %s15, 0
    %p36 = por %p34, %p35
    %p37 = scmp.ne.s32.totalorder %s23, %s24
    %p38 = scmp.eq.s32.totalorder %s16, 1
    %p39 = por %p37, %p38
    %p41 = scmp.ne.s32.totalorder %s24, %s40
    %p42 = scmp.eq.s32.totalorder %s16, 0
    %p43 = por %p41, %p42
    %s45 = sadd.s32 %s44, 1
    %p48 = scmp.eq.s32.totalorder %s10, 1
    %p49 = scmp.ne.s32.totalorder %s44, %s46
    %p50 = scmp.eq.s32.totalorder %s10, 0
    %p51 = por %p49, %p50
    %p52 = scmp.ne.s32.totalorder %s44, %s46
    %p53 = scmp.eq.s32.totalorder %s15, 1
    %p54 = por %p52, %p53
    %p55 = scmp.ne.s32.totalorder %s46, %s47
    %p56 = scmp.eq.s32.totalorder %s15, 0
    %p57 = por %p55, %p56
    %p58 = scmp.ne.s32.totalorder %s46, %s47
    %p59 = scmp.eq.s32.totalorder %s16, 1
    %p60 = por %p58, %p59
    %p62 = scmp.ne.s32.totalorder %s47, %s61
    %p63 = scmp.eq.s32.totalorder %s16, 0
    %p64 = por %p62, %p63
    %s65 = ssub.s32 %s10, %s17
    %p66 = scmp.eq.s32.totalorder %s65, 0
    %s68 = sadd.s32 %s67, 1
    %s69 = scalar_select %p66, %s67, %s68
    %p72 = pneg %p66
    %p73 = scmp.eq.s32.totalorder %s10, 1
    %p74 = por %p72, %p73
    %p75 = scmp.ne.s32.totalorder %s67, %s70
    %p76 = scmp.eq.s32.totalorder %s10, 0
    %p77 = por %p75, %p76
    %p78 = scmp.ne.s32.totalorder %s67, %s70
    %p79 = scmp.eq.s32.totalorder %s15, 1
    %p80 = por %p78, %p79
    %p81 = scmp.ne.s32.totalorder %s70, %s71
    %p82 = scmp.eq.s32.totalorder %s15, 0
    %p83 = por %p81, %p82
    %p84 = scmp.ne.s32.totalorder %s70, %s71
    %p85 = scmp.eq.s32.totalorder %s16, 1
    %p86 = por %p84, %p85
    %p88 = scmp.ne.s32.totalorder %s71, %s87
    %p89 = scmp.eq.s32.totalorder %s16, 0
    %p90 = por %p88, %p89
    %s91 = ssub.s32 %s10, %s17
    %p92 = scmp.eq.s32.totalorder %s91, 0
    %s94 = sadd.s32 %s93, 1
    %s95 = scalar_select %p92, %s93, %s94
    %p98 = pneg %p92
    %p99 = scmp.eq.s32.totalorder %s10, 1
    %p100 = por %p98, %p99
    %p101 = scmp.ne.s32.totalorder %s93, %s96
    %p102 = scmp.eq.s32.totalorder %s10, 0
    %p103 = por %p101, %p102
    %p104 = scmp.ne.s32.totalorder %s93, %s96
    %p105 = scmp.eq.s32.totalorder %s15, 1
    %p106 = por %p104, %p105
    %p107 = scmp.ne.s32.totalorder %s96, %s97
    %p108 = scmp.eq.s32.totalorder %s15, 0
    %p109 = por %p107, %p108
    %p110 = scmp.ne.s32.totalorder %s96, %s97
    %p111 = scmp.eq.s32.totalorder %s16, 1
    %p112 = por %p110, %p111
    %p114 = scmp.ne.s32.totalorder %s97, %s113
    %p115 = scmp.eq.s32.totalorder %s16, 0
    %p116 = por %p114, %p115
    %p117 = scmp.le.s32.totalorder 1, %s10
    %p118 = scmp.lt.s32.totalorder %s10, 3
    %p119 = pnand %p117, %p118
    %p120 = pneg %p119
    // Predicated region
    $region9: #{basic_conv2d.2} parent=5 // pred_check
      _
    $region10: #{basic_conv2d.2} parent=5 // pred_check_branch
      %122 = sbr.rel (%p119) target = $region12
    $region11: #{basic_conv2d.2} parent=5 // pred_region
      %s123 = ssub.s32 %s10, 1
      // Predicated region
      $region13: #{basic_conv2d.2} parent=11 // pred_check
        %p124 = pneg %p57
      $region14: #{basic_conv2d.2} parent=11 // pred_check_branch
        %126 = sbr.rel (%p124) target = $region16
      $region15: #{basic_conv2d.2} parent=11 // pred_region
        _
      $region16: #{basic_conv2d.2} parent=11 // pred_fallthru
        _
    $region12: #{basic_conv2d.2} parent=5 // pred_fallthru
      _
    %p127 = scmp.lt.s32.totalorder %s10, 2
    // Predicated region
    $region17: #{basic_conv2d.2} parent=5 // pred_check
      %p128 = pneg %p127
    $region18: #{basic_conv2d.2} parent=5 // pred_check_branch
      %130 = sbr.rel (%p128) target = $region20
    $region19: #{basic_conv2d.2} parent=5 // pred_region
      // Predicated region
      $region21: #{basic_conv2d.2} parent=19 // pred_check
        %p131 = pneg %p30
      $region22: #{basic_conv2d.2} parent=19 // pred_check_branch
        %133 = sbr.rel (%p131) target = $region24
      $region23: #{basic_conv2d.2} parent=19 // pred_region
        %s134 = smul.u32 2, %s10
        %p135 = scmp.lt.s32.totalorder %s134, 3
        %s136 = scalar_select %p135, %s134, 3
        %s137 = smul.addr %s136, 5
        %s138 = smul.addr %s137, 4
        %s139 = scalar_lea.vmem %s0, %s138
        %s140 = smul.u32 2, %s10
      $region24: #{basic_conv2d.2} parent=19 // pred_fallthru
        _
    $region20: #{basic_conv2d.2} parent=5 // pred_fallthru
      _
    %p141 = scmp.le.s32.totalorder 1, %s10
    %p142 = scmp.lt.s32.totalorder %s10, 3
    %p143 = pnand %p141, %p142
    %p144 = pneg %p143
    // Predicated region
    $region25: #{basic_conv2d.2} parent=5 // pred_check
      _
    $region26: #{basic_conv2d.2} parent=5 // pred_check_branch
      %146 = sbr.rel (%p143) target = $region28
    $region27: #{basic_conv2d.2} parent=5 // pred_region
      %s147 = ssub.s32 %s10, 1
      %s148 = smul.u32 2, %s15
      %p149 = scmp.lt.s32.totalorder %s148, 3
      %s150 = scalar_select %p149, %s148, 3
      %s151 = smul.addr %s150, 5
      %s152 = smul.addr %s151, 4
      %s153 = scalar_lea.vmem %s0, %s152
      %p154 = pneg %p36
      %p155 = pneg %p33
      %p156 = pneg %p57
      %p157 = pneg %p54
      %p158 = pneg %p83
      %p159 = pneg %p80
      %s160 = smul.u32 2, %s15
      %p161 = scmp.lt.s32.totalorder %s160, 3
      %s162 = scalar_select %p161, %s160, 3
      %s163 = smul.addr %s162, 4
      %s164 = scalar_lea.vmem %s2, %s163
      %p165 = pneg %p109
      %p166 = pneg %p106
      %p167 = scmp.lt.s32.totalorder %s15, 1
      %s168 = scalar_select %p167, %s15, 1
      %s169 = smul.addr %s168, 8
      %s170 = scalar_lea.vmem %s3, %s169
      %s171 = smul.u32 2, %s15
      %p172 = scmp.lt.s32.totalorder %s171, 3
      %s173 = scalar_select %p172, %s171, 3
      %s174 = smul.addr %s173, 5
      %s175 = smul.addr %s174, 4
      %s176 = scalar_lea.vmem %s0, %s175
      %s177 = smul.u32 2, %s15
      %s178 = smul.u32 2, %s15
      %p179 = scmp.lt.s32.totalorder %s178, 3
      %s180 = scalar_select %p179, %s178, 3
      %s181 = smul.addr %s180, 4
      %s182 = scalar_lea.vmem %s2, %s181
      %s183 = smul.u32 2, %s15
      %p184 = scmp.lt.s32.totalorder %s15, 1
      %s185 = scalar_select %p184, %s15, 1
      %s186 = smul.addr %s185, 8
      %s187 = scalar_lea.vmem %s3, %s186
      %v189 = vld [vmem:[%s176] sm:$0xff]
      %v190 = vld [vmem:[%s176 + $0x8] sm:$0xff]
      %v191 = vld [vmem:[%s176 + $0x10] sm:$0xf]
      %v192 = vld [vmem:[%s176 + $0x14] sm:$0xff]
      %v193 = vld [vmem:[%s176 + $0x1c] sm:$0xff]
      %v194 = vld [vmem:[%s176 + $0x24] sm:$0xf]
      %v195 = vld [vmem:[%s1] sm:$0xf]
      %v196 = vld [vmem:[%s1 + $0x4] sm:$0xf]
      %v197 = vld [vmem:[%s1 + $0x8] sm:$0xf]
      %v198 = vld [vmem:[%s1 + $0xc] sm:$0xf]
      %v199 = vld [vmem:[%s1 + $0x10] sm:$0xf]
      %v200 = vld [vmem:[%s1 + $0x14] sm:$0xf]
      %v201 = vld [vmem:[%s1 + $0x18] sm:$0xf]
      %v202 = vld [vmem:[%s1 + $0x1c] sm:$0xf]
      %v203 = vld [vmem:[%s1 + $0x20] sm:$0xf]
      %v204 = vld [vmem:[%s1 + $0x24] sm:$0xf]
      %v205 = vld [vmem:[%s1 + $0x28] sm:$0xf]
      %v206 = vld [vmem:[%s1 + $0x2c] sm:$0xf]
      %v207 = vld [vmem:[%s1 + $0x30] sm:$0xf]
      %v208 = vld [vmem:[%s1 + $0x34] sm:$0xf]
      %v209 = vld [vmem:[%s1 + $0x38] sm:$0xf]
      %v210 = vld [vmem:[%s1 + $0x3c] sm:$0xf]
      %v211 = vld [vmem:[%s1 + $0x40] sm:$0xf]
      %v212 = vld [vmem:[%s1 + $0x44] sm:$0xf]
      %v213 = vld [vmem:[%s1 + $0x48] sm:$0xf]
      %v214 = vld [vmem:[%s1 + $0x4c] sm:$0xf]
      %v215 = vld [vmem:[%s1 + $0x50] sm:$0xf]
      %v216 = vld [vmem:[%s1 + $0x54] sm:$0xf]
      %v217 = vld [vmem:[%s1 + $0x58] sm:$0xf]
      %v218 = vld [vmem:[%s1 + $0x5c] sm:$0xf]
      %v219 = vld [vmem:[%s1 + $0x60] sm:$0xf]
      %v220 = vld [vmem:[%s1 + $0x64] sm:$0xf]
      %v221 = vld [vmem:[%s1 + $0x68] sm:$0xf]
      %v222 = vld [vmem:[%s1 + $0x6c] sm:$0xf]
      %v223 = vld [vmem:[%s1 + $0x70] sm:$0xf]
      %v224 = vld [vmem:[%s1 + $0x74] sm:$0xf]
      %v225 = vld [vmem:[%s1 + $0x78] sm:$0xf]
      %v226 = vld [vmem:[%s1 + $0x7c] sm:$0xf]
      %v227 = vld [vmem:[%s1 + $0x80] sm:$0xf]
      %v228 = vld [vmem:[%s1 + $0x84] sm:$0xf]
      %v229 = vld [vmem:[%s1 + $0x88] sm:$0xf]
      %v230 = vld [vmem:[%s1 + $0x8c] sm:$0xf]
      %v231 = vld [vmem:[%s1 + $0x90] sm:$0xf]
      %v232 = vld [vmem:[%s1 + $0x94] sm:$0xf]
      %v233 = vld [vmem:[%s1 + $0x98] sm:$0xf]
      %v234 = vld [vmem:[%s1 + $0x9c] sm:$0xf]
      %v235 = vld [vmem:[%s1 + $0xa0] sm:$0xf]
      %v236 = vld [vmem:[%s1 + $0xa4] sm:$0xf]
      %v237 = vld [vmem:[%s1 + $0xa8] sm:$0xf]
      %v238 = vld [vmem:[%s1 + $0xac] sm:$0xf]
      %v239 = vld [vmem:[%s1 + $0xb0] sm:$0xf]
      %v240 = vld [vmem:[%s1 + $0xb4] sm:$0xf]
      %v241 = vld [vmem:[%s1 + $0xb8] sm:$0xf]
      %v242 = vld [vmem:[%s1 + $0xbc] sm:$0xf]
      %v243 = vld [vmem:[%s1 + $0xc0] sm:$0xf]
      %v244 = vld [vmem:[%s1 + $0xc4] sm:$0xf]
      %v245 = vld [vmem:[%s1 + $0xc8] sm:$0xf]
      %v246 = vld [vmem:[%s1 + $0xcc] sm:$0xf]
      %v247 = vld [vmem:[%s1 + $0xd0] sm:$0xf]
      %v248 = vld [vmem:[%s1 + $0xd4] sm:$0xf]
      %v249 = vld [vmem:[%s1 + $0xd8] sm:$0xf]
      %v250 = vld [vmem:[%s1 + $0xdc] sm:$0xf]
      %v251 = vld [vmem:[%s1 + $0xe0] sm:$0xf]
      %v252 = vld [vmem:[%s1 + $0xe4] sm:$0xf]
      %v253 = vld [vmem:[%s1 + $0xe8] sm:$0xf]
      %v254 = vld [vmem:[%s1 + $0xec] sm:$0xf]
      %v255 = vld [vmem:[%s1 + $0xf0] sm:$0xf]
      %v256 = vld [vmem:[%s1 + $0xf4] sm:$0xf]
      %v257 = vld [vmem:[%s1 + $0xf8] sm:$0xf]
      %v258 = vld [vmem:[%s1 + $0xfc] sm:$0xf]
      %v259 = vld [vmem:[%s1 + $0x100] sm:$0xf]
      %v260 = vld [vmem:[%s1 + $0x104] sm:$0xf]
      %v261 = vld [vmem:[%s1 + $0x108] sm:$0xf]
      %v262 = vld [vmem:[%s1 + $0x10c] sm:$0xf]
      %v263 = vld [vmem:[%s1 + $0x110] sm:$0xf]
      %v264 = vld [vmem:[%s1 + $0x114] sm:$0xf]
      %v265 = vld [vmem:[%s1 + $0x118] sm:$0xf]
      %v266 = vld [vmem:[%s1 + $0x11c] sm:$0xf]
      %v273 = vunpack.c.l.b16 %v189
      %v274 = vunpack.c.h.b16 %v189
      %v275 = vunpack.c.l.b16 %v190
      %v276 = vunpack.c.h.b16 %v190
      %v277 = vunpack.c.l.b16 %v191
      %v278 = vunpack.c.l.b16 %v192
      %v279 = vunpack.c.h.b16 %v192
      %v280 = vunpack.c.l.b16 %v193
      %v281 = vunpack.c.h.b16 %v193
      %v282 = vunpack.c.l.b16 %v194
      %v283 = vpack.c.b16 %v278, %v273
      %v284 = vpack.c.b16 %v279, %v274
      %v285 = vpack.c.b16 %v280, %v275
      %v286 = vpack.c.b16 %v281, %v276
      %v287 = vpack.c.b16 %v282, %v277
      %v364 = vunpack.c.l.b16 %v195
      %v365 = vunpack.c.l.b16 %v196
      %v366 = vunpack.c.l.b16 %v197
      %v367 = vunpack.c.l.b16 %v198
      %v368 = vunpack.c.l.b16 %v199
      %v369 = vunpack.c.l.b16 %v200
      %v370 = vunpack.c.l.b16 %v201
      %v371 = vunpack.c.l.b16 %v202
      %v372 = vunpack.c.l.b16 %v203
      %v373 = vunpack.c.l.b16 %v204
      %v374 = vunpack.c.l.b16 %v205
      %v375 = vunpack.c.l.b16 %v206
      %v376 = vunpack.c.l.b16 %v207
      %v377 = vunpack.c.l.b16 %v208
      %v378 = vunpack.c.l.b16 %v209
      %v379 = vunpack.c.l.b16 %v210
      %v380 = vunpack.c.l.b16 %v211
      %v381 = vunpack.c.l.b16 %v212
      %v382 = vunpack.c.l.b16 %v213
      %v383 = vunpack.c.l.b16 %v214
      %v384 = vunpack.c.l.b16 %v215
      %v385 = vunpack.c.l.b16 %v216
      %v386 = vunpack.c.l.b16 %v217
      %v387 = vunpack.c.l.b16 %v218
      %v388 = vunpack.c.l.b16 %v219
      %v389 = vunpack.c.l.b16 %v220
      %v390 = vunpack.c.l.b16 %v221
      %v391 = vunpack.c.l.b16 %v222
      %v392 = vunpack.c.l.b16 %v223
      %v393 = vunpack.c.l.b16 %v224
      %v394 = vunpack.c.l.b16 %v225
      %v395 = vunpack.c.l.b16 %v226
      %v396 = vunpack.c.l.b16 %v227
      %v397 = vunpack.c.l.b16 %v228
      %v398 = vunpack.c.l.b16 %v229
      %v399 = vunpack.c.l.b16 %v230
      %v400 = vunpack.c.l.b16 %v231
      %v401 = vunpack.c.l.b16 %v232
      %v402 = vunpack.c.l.b16 %v233
      %v403 = vunpack.c.l.b16 %v234
      %v404 = vunpack.c.l.b16 %v235
      %v405 = vunpack.c.l.b16 %v236
      %v406 = vunpack.c.l.b16 %v237
      %v407 = vunpack.c.l.b16 %v238
      %v408 = vunpack.c.l.b16 %v239
      %v409 = vunpack.c.l.b16 %v240
      %v410 = vunpack.c.l.b16 %v241
      %v411 = vunpack.c.l.b16 %v242
      %v412 = vunpack.c.l.b16 %v243
      %v413 = vunpack.c.l.b16 %v244
      %v414 = vunpack.c.l.b16 %v245
      %v415 = vunpack.c.l.b16 %v246
      %v416 = vunpack.c.l.b16 %v247
      %v417 = vunpack.c.l.b16 %v248
      %v418 = vunpack.c.l.b16 %v249
      %v419 = vunpack.c.l.b16 %v250
      %v420 = vunpack.c.l.b16 %v251
      %v421 = vunpack.c.l.b16 %v252
      %v422 = vunpack.c.l.b16 %v253
      %v423 = vunpack.c.l.b16 %v254
      %v424 = vunpack.c.l.b16 %v255
      %v425 = vunpack.c.l.b16 %v256
      %v426 = vunpack.c.l.b16 %v257
      %v427 = vunpack.c.l.b16 %v258
      %v428 = vunpack.c.l.b16 %v259
      %v429 = vunpack.c.l.b16 %v260
      %v430 = vunpack.c.l.b16 %v261
      %v431 = vunpack.c.l.b16 %v262
      %v432 = vunpack.c.l.b16 %v263
      %v433 = vunpack.c.l.b16 %v264
      %v434 = vunpack.c.l.b16 %v265
      %v435 = vunpack.c.l.b16 %v266
      %v436 = vpack.c.b16 %v365, %v364
      %v437 = vpack.c.b16 %v367, %v366
      %v438 = vpack.c.b16 %v369, %v368
      %v439 = vpack.c.b16 %v371, %v370
      %v440 = vpack.c.b16 %v373, %v372
      %v441 = vpack.c.b16 %v375, %v374
      %v442 = vpack.c.b16 %v377, %v376
      %v443 = vpack.c.b16 %v379, %v378
      %v444 = vpack.c.b16 %v381, %v380
      %v445 = vpack.c.b16 %v383, %v382
      %v446 = vpack.c.b16 %v385, %v384
      %v447 = vpack.c.b16 %v387, %v386
      %v448 = vpack.c.b16 %v389, %v388
      %v449 = vpack.c.b16 %v391, %v390
      %v450 = vpack.c.b16 %v393, %v392
      %v451 = vpack.c.b16 %v395, %v394
      %v452 = vpack.c.b16 %v397, %v396
      %v453 = vpack.c.b16 %v399, %v398
      %v454 = vpack.c.b16 %v401, %v400
      %v455 = vpack.c.b16 %v403, %v402
      %v456 = vpack.c.b16 %v405, %v404
      %v457 = vpack.c.b16 %v407, %v406
      %v458 = vpack.c.b16 %v409, %v408
      %v459 = vpack.c.b16 %v411, %v410
      %v460 = vpack.c.b16 %v413, %v412
      %v461 = vpack.c.b16 %v415, %v414
      %v462 = vpack.c.b16 %v417, %v416
      %v463 = vpack.c.b16 %v419, %v418
      %v464 = vpack.c.b16 %v421, %v420
      %v465 = vpack.c.b16 %v423, %v422
      %v466 = vpack.c.b16 %v425, %v424
      %v467 = vpack.c.b16 %v427, %v426
      %v468 = vpack.c.b16 %v429, %v428
      %v469 = vpack.c.b16 %v431, %v430
      %v470 = vpack.c.b16 %v433, %v432
      %v471 = vpack.c.b16 %v435, %v434
      %vm508 = vcmask 523264
      %v510 = vsel %vm508, %v287, 0
      %512 = vmatprep.subr.bf16.mxu0 0
      %513 = vmatpush1.bf16.msra.mxu0 %v436
      %514 = vmatprep.subr.bf16.mxu0 0
      %515 = vmatpush1.bf16.msra.mxu0 %v437
      %516 = vmatprep.subr.bf16.mxu0 0
      %517 = vmatpush1.bf16.msra.mxu0 %v438
      %518 = vmatprep.subr.bf16.mxu0 0
      %519 = vmatpush1.bf16.msra.mxu0 %v439
      %520 = vmatprep.subr.bf16.mxu0 0
      %521 = vmatpush1.bf16.msra.mxu0 %v440
      %522 = vmatprep.subr.bf16.mxu0 0
      %523 = vmatpush1.bf16.msra.mxu0 %v441
      %524 = vmatprep.subr.bf16.mxu0 0
      %525 = vmatpush1.bf16.msra.mxu0 %v442
      %526 = vmatprep.subr.bf16.mxu0 0
      %527 = vmatpush1.bf16.msra.mxu0 %v443
      %528 = vmatprep.subr.bf16.mxu0 0
      %529 = vmatpush1.bf16.msra.mxu0 %v444
      %530 = vmatprep.subr.bf16.mxu0 0
      %531 = vmatpush1.bf16.msra.mxu0 %v445
      %532 = vmatprep.subr.bf16.mxu0 0
      %533 = vmatpush1.bf16.msra.mxu0 %v446
      %534 = vmatprep.subr.bf16.mxu0 0
      %535 = vmatpush1.bf16.msra.mxu0 %v447
      %536 = vmatprep.subr.bf16.mxu0 0
      %537 = vmatpush1.bf16.msra.mxu0 %v448
      %538 = vmatprep.subr.bf16.mxu0 0
      %539 = vmatpush1.bf16.msra.mxu0 %v449
      %540 = vmatprep.subr.bf16.mxu0 0
      %541 = vmatpush1.bf16.msra.mxu0 %v450
      %542 = vmatprep.subr.bf16.mxu0 0
      %543 = vmatpush1.bf16.msra.mxu0 %v451
      %544 = vmatprep.mubr.bf16.mxu0 %v284
      %545 = vmatmul.mubr.bf16.gmra.mrb[0].mxu0 %v283
      %v546 = vpop.f32.mrb[0].mxu0
      %v547 = vadd.f32 0.0, %v546
      %v548 = vpop.f32.mrb[0].mxu0
      %v549 = vpop.f32.mrb[0].mxu0
      %v550 = vadd.f32 0.0, %v549
      %v551 = vpop.f32.mrb[0].mxu0
      %552 = vdwg.mxu0
      %553 = vmatprep.subr.bf16.mxu0 0
      %554 = vmatpush1.bf16.msra.mxu0 %v452
      %555 = vmatprep.subr.bf16.mxu0 0
      %556 = vmatpush1.bf16.msra.mxu0 %v453
      %557 = vmatprep.subr.bf16.mxu0 0
      %558 = vmatpush1.bf16.msra.mxu0 %v454
      %559 = vmatprep.subr.bf16.mxu0 0
      %560 = vmatpush1.bf16.msra.mxu0 %v455
      %561 = vmatprep.subr.bf16.mxu0 0
      %562 = vmatpush1.bf16.msra.mxu0 %v456
      %563 = vmatprep.subr.bf16.mxu0 0
      %564 = vmatpush1.bf16.msra.mxu0 %v457
      %565 = vmatprep.subr.bf16.mxu0 0
      %566 = vmatpush1.bf16.msra.mxu0 %v458
      %567 = vmatprep.subr.bf16.mxu0 0
      %568 = vmatpush1.bf16.msra.mxu0 %v459
      %569 = vmatprep.subr.bf16.mxu0 0
      %570 = vmatpush1.bf16.msra.mxu0 %v460
      %571 = vmatprep.subr.bf16.mxu0 0
      %572 = vmatpush1.bf16.msra.mxu0 %v461
      %573 = vmatprep.subr.bf16.mxu0 0
      %574 = vmatpush1.bf16.msra.mxu0 %v462
      %575 = vmatprep.subr.bf16.mxu0 0
      %576 = vmatpush1.bf16.msra.mxu0 %v463
      %577 = vmatprep.subr.bf16.mxu0 0
      %578 = vmatpush1.bf16.msra.mxu0 %v464
      %579 = vmatprep.subr.bf16.mxu0 0
      %580 = vmatpush1.bf16.msra.mxu0 %v465
      %581 = vmatprep.subr.bf16.mxu0 0
      %582 = vmatpush1.bf16.msra.mxu0 %v466
      %583 = vmatprep.subr.bf16.mxu0 0
      %584 = vmatpush1.bf16.msra.mxu0 %v467
      %585 = vmatprep.mubr.bf16.mxu0 %v286
      %586 = vmatmul.mubr.bf16.gmra.mrb[0].mxu0 %v285
      %v587 = vpop.f32.mrb[0].mxu0
      %v588 = vadd.f32 %v547, %v587
      %v589 = vpop.f32.mrb[0].mxu0
      %v590 = vpop.f32.mrb[0].mxu0
      %v591 = vadd.f32 %v550, %v590
      %v592 = vpop.f32.mrb[0].mxu0
      %593 = vdwg.mxu0
      %594 = vmatprep.subr.bf16.mxu0 0
      %595 = vmatpush1.bf16.msra.mxu0 %v468
      %596 = vmatprep.subr.bf16.mxu0 0
      %597 = vmatpush1.bf16.msra.mxu0 %v469
      %598 = vmatprep.subr.bf16.mxu0 0
      %599 = vmatpush1.bf16.msra.mxu0 %v470
      %600 = vmatprep.subr.bf16.mxu0 0
      %601 = vmatpush1.bf16.msra.mxu0 %v471
      %602 = vmatprep.subr.bf16.mxu0 0
      %603 = vmatpush1.bf16.msra.mxu0 0
      %604 = vmatprep.subr.bf16.mxu0 0
      %605 = vmatpush1.bf16.msra.mxu0 0
      %606 = vmatprep.subr.bf16.mxu0 0
      %607 = vmatpush1.bf16.msra.mxu0 0
      %608 = vmatprep.subr.bf16.mxu0 0
      %609 = vmatpush1.bf16.msra.mxu0 0
      %610 = vmatprep.subr.bf16.mxu0 0
      %611 = vmatpush1.bf16.msra.mxu0 0
      %612 = vmatprep.subr.bf16.mxu0 0
      %613 = vmatpush1.bf16.msra.mxu0 0
      %614 = vmatprep.subr.bf16.mxu0 0
      %615 = vmatpush1.bf16.msra.mxu0 0
      %616 = vmatprep.subr.bf16.mxu0 0
      %617 = vmatpush1.bf16.msra.mxu0 0
      %618 = vmatprep.subr.bf16.mxu0 0
      %619 = vmatpush1.bf16.msra.mxu0 0
      %620 = vmatprep.subr.bf16.mxu0 0
      %621 = vmatpush1.bf16.msra.mxu0 0
      %622 = vmatprep.subr.bf16.mxu0 0
      %623 = vmatpush1.bf16.msra.mxu0 0
      %624 = vmatprep.subr.bf16.mxu0 0
      %625 = vmatpush1.bf16.msra.mxu0 0
      %626 = vmatprep.mubr.bf16.mxu0 0
      %627 = vmatmul.mubr.bf16.gmra.mrb[0].mxu0 %v510
      %v628 = vpop.f32.mrb[0].mxu0
      %v629 = vadd.f32 %v588, %v628
      %v630 = vpop.f32.mrb[0].mxu0
      %v631 = vpop.f32.mrb[0].mxu0
      %v632 = vadd.f32 %v591, %v631
      %v633 = vpop.f32.mrb[0].mxu0
      %634 = vdwg.mxu0
      %v635 = vpack.c.bf16 %v632, %v629
      %v637 = vunpack.c.l.b16 %v635
      %v638 = vunpack.c.h.b16 %v635
      %v639 = vpack.c.b16 %v637, %v637
      %v640 = vpack.c.b16 %v638, %v638
      %643 = vst [vmem:[%s182] sm:$0xf] %v639
      %644 = vst [vmem:[%s182 + $0x4] sm:$0xf] %v640
      %v645 = vadd.f32 %v629, %v632
      %v646 = vrot.slane %v645, 4
      %v647 = vadd.f32 %v645, %v646
      %v648 = vrot.slane %v647, 2
      %v649 = vadd.f32 %v647, %v648
      %v650 = vrot.slane %v649, 1
      %v651 = vadd.f32 %v649, %v650
      %v652 = vmul.f32 %v629, %v629
      %v653 = vmul.f32 %v632, %v632
      %v654 = vadd.f32 %v652, %v653
      %v655 = vrot.slane %v654, 4
      %v656 = vadd.f32 %v654, %v655
      %v657 = vrot.slane %v656, 2
      %v658 = vadd.f32 %v656, %v657
      %v659 = vrot.slane %v658, 1
      %v660 = vadd.f32 %v658, %v659
      %vm661 = vcmask 1040384
      %v662 = vsel %vm661, %v651, %v660
      %vm663 = vcmask 1041408
      %v664 = vsel %vm663, %v662, 0.0
      %665 = vst [vmem:[%s187] sm:$0xff] %v664
      %s666 = smul.u32 2, %s15
      %p667 = scmp.lt.s32.totalorder %s666, 3
      %s668 = scalar_select %p667, %s666, 3
      %s669 = smul.addr %s668, 4
      %s670 = scalar_lea.vmem %s2, %s669
      %p671 = scmp.lt.s32.totalorder %s15, 1
      %s672 = scalar_select %p671, %s15, 1
      %s673 = smul.addr %s672, 8
      %s674 = scalar_lea.vmem %s3, %s673
      // Predicated region
      $region29: #{basic_conv2d.2} parent=27 // pred_check
        %p675 = pneg %p80
      $region30: #{basic_conv2d.2} parent=27 // pred_check_branch
        %677 = sbr.rel (%p675) target = $region32
      $region31: #{basic_conv2d.2} parent=27 // pred_region
        %s678 = smul.u32 2, %s15
      $region32: #{basic_conv2d.2} parent=27 // pred_fallthru
        _
      // Predicated region
      $region33: #{basic_conv2d.2} parent=27 // pred_check
        %p679 = pneg %p106
      $region34: #{basic_conv2d.2} parent=27 // pred_check_branch
        %681 = sbr.rel (%p679) target = $region36
      $region35: #{basic_conv2d.2} parent=27 // pred_region
        _
      $region36: #{basic_conv2d.2} parent=27 // pred_fallthru
        _
    $region28: #{basic_conv2d.2} parent=5 // pred_fallthru
      _
    %p682 = scmp.le.s32.totalorder 2, %s10
    // Predicated region
    $region37: #{basic_conv2d.2} parent=5 // pred_check
      %p683 = pneg %p682
    $region38: #{basic_conv2d.2} parent=5 // pred_check_branch
      %685 = sbr.rel (%p683) target = $region40
    $region39: #{basic_conv2d.2} parent=5 // pred_region
      %s686 = ssub.s32 %s10, 2
      // Predicated region
      $region41: #{basic_conv2d.2} parent=39 // pred_check
        %p687 = pneg %p86
      $region42: #{basic_conv2d.2} parent=39 // pred_check_branch
        %689 = sbr.rel (%p687) target = $region44
      $region43: #{basic_conv2d.2} parent=39 // pred_region
        %s690 = smul.u32 2, %s16
        %p691 = scmp.lt.s32.totalorder %s690, 3
        %s692 = scalar_select %p691, %s690, 3
        %s693 = smul.addr %s692, 4
        %s694 = scalar_lea.vmem %s2, %s693
      $region44: #{basic_conv2d.2} parent=39 // pred_fallthru
        _
      // Predicated region
      $region45: #{basic_conv2d.2} parent=39 // pred_check
        %p695 = pneg %p112
      $region46: #{basic_conv2d.2} parent=39 // pred_check_branch
        %697 = sbr.rel (%p695) target = $region48
      $region47: #{basic_conv2d.2} parent=39 // pred_region
        %p698 = scmp.lt.s32.totalorder %s16, 1
        %s699 = scalar_select %p698, %s16, 1
        %s700 = smul.addr %s699, 8
        %s701 = scalar_lea.vmem %s3, %s700
      $region48: #{basic_conv2d.2} parent=39 // pred_fallthru
        _
    $region40: #{basic_conv2d.2} parent=5 // pred_fallthru
      _
  $region6: #{basic_conv2d.2} parent=0 // loop_footer
    %s14 = sadd.s32 1, %s10
  $region7: #{basic_conv2d.2} parent=0 // loop_footer_branch
    %9 = sbr.rel target = $region3
  $region8: #{basic_conv2d.2} parent=0 // loop_exit
    _

</llo_original>
